<compile_context>
chip_gen: v5e
topology: v5e:2x2
jax: 0.10.0
libtpu: 0.0.40
codegen_flags: <defaults>
</compile_context>

<pallas_src>
import jax
import jax.numpy as jnp
from jax.experimental import pallas as pl
from jax.experimental.pallas import tpu as pltpu

_LANE = 128
_SUBLANE = 16                       # bf16 sublane packing (also fine for f32)
_VMEM_BUDGET = 48 * 1024 * 1024     # portable working-set budget (v7x physical VMEM = 64 MiB)


def _round_up(x, m):
    return ((x + m - 1) // m) * m


def _pick_tile(padded, candidates):
    # `padded` is always a multiple of 128 and the candidate list ends in 128,
    # so this never falls through to a "whole dimension" tile.
    for c in candidates:
        if padded % c == 0:
            return c
    raise ValueError(f"no tile in {candidates} divides {padded}")


def _select_tiles(B, tN0, F_pad, E_pad, C_pad, compute_dtype, block_b):
    """Pick (tB, B_pad, tN, vmem_limit) for a given batch size.

    tB is as large as possible (<=256) to amortize feature re-streaming, but capped so
    that there are >= 2 parallel batch tiles whenever B > 16 (v7x megacore). Tiles are
    then shrunk if needed to fit a portable VMEM budget.
    """
    if block_b is not None:
        tB = block_b
    else:
        tB = min(256, _round_up(B, _SUBLANE))
        # Guarantee >= 2 parallel batch tiles when B permits, so both v7x TensorCores
        # get work under dimension_semantics=("parallel", ...). No-op on v5e/v6e.
        while B > _SUBLANE and _round_up(B, tB) // tB < 2 and tB > _SUBLANE:
            tB //= 2
    B_pad = _round_up(B, tB)

    itemsize = jnp.dtype(compute_dtype).itemsize

    def est(tb, tn):
        return (2 * tb * tn * itemsize                              # adj (double-buffered)
                + 2 * tn * F_pad * itemsize                         # feats tile
                + 2 * tb * F_pad * itemsize                         # self feats tile
                + 2 * (2 * F_pad * E_pad + E_pad * C_pad) * itemsize  # resident weights
                + 2 * tb * C_pad * 4                                # f32 output block
                + tb * F_pad * 4)                                   # f32 accumulator scratch

    tN = tN0
    while est(tB, tN) > _VMEM_BUDGET and tN > _LANE:
        tN //= 2                      # power-of-2 multiples of 128 -> still divides N_pad
    while est(tB, tN) > _VMEM_BUDGET and tB > _SUBLANE:
        tB //= 2
        B_pad = _round_up(B, tB)

    # Never lower the limit below any generation's default; cap with headroom under
    # v7x's 64 MiB physical VMEM.
    vmem_limit = int(min(60 << 20, max(32 << 20, 2 * est(tB, tN))))
    return tB, B_pad, tN, vmem_limit


def _graphsage_fwd_kernel(adj_ref, x_ref, xself_ref, wself_ref, wneigh_ref,
                          wcls_ref, out_ref, acc_ref):
    k = pl.program_id(1)
    last = pl.num_programs(1) - 1

    # Mean-aggregation partial sum for this graph-node tile: (tB, tN) @ (tN, F) on the MXU.
    part = jnp.dot(adj_ref[...], x_ref[...], preferred_element_type=jnp.float32)

    @pl.when(k == 0)
    def _():
        acc_ref[...] = part           # init with first partial product (no zero-fill + add)

    @pl.when(k != 0)
    def _():
        acc_ref[...] += part

    @pl.when(k == last)
    def _():
        # Encoder without concat: relu(self @ W_self^T + neigh @ W_neigh^T).
        # NOTE: rounding the f32 accumulator to the compute dtype is one extra rounding
        # step vs. PyTorch (matched by _reference_forward_matched).
        neigh = acc_ref[...].astype(x_ref.dtype)
        h = jnp.dot(xself_ref[...], wself_ref[...], preferred_element_type=jnp.float32)
        h = h + jnp.dot(neigh, wneigh_ref[...], preferred_element_type=jnp.float32)
        h = jnp.maximum(h, 0.0)
        # Classifier: (weight.mm(embeds)).t() == embeds.T @ weight.T  (lane-dense, 128-wide)
        out_ref[...] = jnp.dot(h.astype(wcls_ref.dtype), wcls_ref[...],
                               preferred_element_type=jnp.float32)


def make_supervised_graphsage_forward(feats, w_enc, w_cls, *,
                                      compute_dtype=jnp.bfloat16,
                                      block_b=None, block_n=None):
    """Pads/casts the graph features and parameters ONCE and returns a jitted
    forward(adj_norm, self_feats) -> (B, C) float32 scores (== PyTorch `scores.t()`).

    feats: (N, F) graph node features. w_enc: (E, 2F) encoder weight. w_cls: (C, E).
    adj_norm: (B, N) row-normalized adjacency of the batch nodes. self_feats: (B, F).
    """
    feats = jnp.asarray(feats)
    w_enc = jnp.asarray(w_enc)
    w_cls = jnp.asarray(w_cls)
    N, F = feats.shape
    E = w_enc.shape[0]
    C = w_cls.shape[0]
    assert w_enc.shape == (E, 2 * F) and w_cls.shape == (C, E)

    F_pad = _round_up(F, _LANE)
    E_pad = _round_up(E, _LANE)
    C_pad = _round_up(C, _LANE)      # lane-dense output block; sliced back to C afterwards
    N_pad = _round_up(N, _LANE)
    tN0 = block_n if block_n is not None else _pick_tile(
        N_pad, (2048, 1024, 512, 256, 128))

    cd = compute_dtype
    # --- hoisted out of the per-call path: padded graph features + split weights ---
    feats_p = jnp.zeros((N_pad, F_pad), cd).at[:N, :F].set(feats.astype(cd))
    wself_p = jnp.zeros((F_pad, E_pad), cd).at[:F, :E].set(w_enc[:, :F].T.astype(cd))
    wneigh_p = jnp.zeros((F_pad, E_pad), cd).at[:F, :E].set(w_enc[:, F:].T.astype(cd))
    wcls_p = jnp.zeros((E_pad, C_pad), cd).at[:E, :C].set(w_cls.T.astype(cd))

    def forward(adj_norm, self_feats):
        B = adj_norm.shape[0]
        assert adj_norm.shape == (B, N) and self_feats.shape == (B, F)

        tB, B_pad, tN, vmem_limit = _select_tiles(B, tN0, F_pad, E_pad, C_pad, cd, block_b)
        grid = (B_pad // tB, N_pad // tN)

        # Only the per-batch tensors are padded per call.
        adj_p = jnp.zeros((B_pad, N_pad), cd).at[:B, :N].set(adj_norm.astype(cd))
        xself_p = jnp.zeros((B_pad, F_pad), cd).at[:B, :F].set(self_feats.astype(cd))

        out = pl.pallas_call(
            _graphsage_fwd_kernel,
            out_shape=jax.ShapeDtypeStruct((B_pad, C_pad), jnp.float32),
            grid=grid,
            in_specs=[
                pl.BlockSpec((tB, tN), lambda i, k: (i, k)),         # adj tile (streamed)
                pl.BlockSpec((tN, F_pad), lambda i, k: (k, 0)),      # feats tile (streamed over N)
                pl.BlockSpec((tB, F_pad), lambda i, k: (i, 0)),      # self feats tile
                pl.BlockSpec((F_pad, E_pad), lambda i, k: (0, 0)),   # W_self^T   (resident)
                pl.BlockSpec((F_pad, E_pad), lambda i, k: (0, 0)),   # W_neigh^T  (resident)
                pl.BlockSpec((E_pad, C_pad), lambda i, k: (0, 0)),   # W_cls^T    (resident)
            ],
            out_specs=pl.BlockSpec((tB, C_pad), lambda i, k: (i, 0)),
            scratch_shapes=[pltpu.VMEM((tB, F_pad), jnp.float32)],   # neigh accumulator
            compiler_params=pltpu.CompilerParams(
                dimension_semantics=("parallel", "arbitrary"),
                vmem_limit_bytes=vmem_limit),
        )(adj_p, feats_p, xself_p, wself_p, wneigh_p, wcls_p)

        return out[:B, :C]

    return jax.jit(forward)


def supervised_graphsage_forward(adj_norm, feats, self_feats, w_enc, w_cls, *,
                                 compute_dtype=jnp.bfloat16,
                                 block_b=None, block_n=None):
    """One-shot convenience wrapper. Prefer make_supervised_graphsage_forward() to reuse
    the padded graph features / weights across many forward calls."""
    fwd = make_supervised_graphsage_forward(feats, w_enc, w_cls,
                                            compute_dtype=compute_dtype,
                                            block_b=block_b, block_n=block_n)
    return fwd(adj_norm, self_feats)


def _reference_forward(adj_norm, feats, self_feats, w_enc, w_cls):
    # Pure-JAX reference mirroring the PyTorch module exactly (full f32 precision).
    hp = jax.lax.Precision.HIGHEST
    neigh = jnp.dot(adj_norm, feats, precision=hp)                   # MeanAggregator
    combined = jnp.concatenate([self_feats, neigh], axis=1)
    embeds = jax.nn.relu(jnp.dot(w_enc, combined.T, precision=hp))   # Encoder -> (E, B)
    scores = jnp.dot(w_cls, embeds, precision=hp)                    # weight.mm(embeds)
    return scores.T                                                  # scores.t()


def _reference_forward_matched(adj_norm, feats, self_feats, w_enc, w_cls, compute_dtype):
    # Reference matching the kernel's cast points (inputs -> compute_dtype, f32 accumulate),
    # so the bf16 path can be checked tightly.
    F = feats.shape[1]
    hp = jax.lax.Precision.HIGHEST
    c = lambda a: a.astype(compute_dtype).astype(jnp.float32)
    neigh = jnp.dot(c(adj_norm), c(feats), precision=hp)
    h = (jnp.dot(c(self_feats), c(w_enc[:, :F].T), precision=hp)
         + jnp.dot(c(neigh), c(w_enc[:, F:].T), precision=hp))
    h = jnp.maximum(h, 0.0)
    return jnp.dot(c(h), c(w_cls.T), precision=hp)


if __name__ == "__main__":
    # Small deterministic problem exercising every padding/tiling path:
    #   B=24 batch nodes, N=300 graph nodes, F=100 feats, E=80 embed, C=7 classes.
    #   -> tB=16 (B_pad=32, two "parallel" batch tiles, exercising the megacore axis),
    #      tN=128 (N_pad=384, three "arbitrary" reduction steps),
    #      F_pad = E_pad = C_pad = 128.
    B, N, F, E, C = 24, 300, 100, 80, 7

    key = jax.random.PRNGKey(0)
    k_feat, k_adj, k_enc, k_cls = jax.random.split(key, 4)

    feats = jax.random.normal(k_feat, (N, F), dtype=jnp.float32)

    # Random binary adjacency with guaranteed >=1 neighbor per batch node; row-normalize.
    adj = (jax.random.uniform(k_adj, (B, N)) < 0.1).astype(jnp.float32)
    adj = adj.at[jnp.arange(B), jnp.arange(B)].set(1.0)
    adj_norm = adj / jnp.sum(adj, axis=1, keepdims=True)

    # Batch nodes are graph nodes 0..B-1; their own features:
    self_feats = feats[:B]

    # Xavier-uniform parameter init (matches init.xavier_uniform_ shapes).
    bound_enc = (6.0 / (E + 2 * F)) ** 0.5
    w_enc = jax.random.uniform(k_enc, (E, 2 * F), minval=-bound_enc,
                               maxval=bound_enc, dtype=jnp.float32)
    bound_cls = (6.0 / (C + E)) ** 0.5
    w_cls = jax.random.uniform(k_cls, (C, E), minval=-bound_cls,
                               maxval=bound_cls, dtype=jnp.float32)

    # --- f32 path: exact check against the PyTorch-style reference ---
    fwd_f32 = make_supervised_graphsage_forward(feats, w_enc, w_cls,
                                                compute_dtype=jnp.float32)
    out_f32 = jax.block_until_ready(fwd_f32(adj_norm, self_feats))
    ref_f32 = _reference_forward(adj_norm, feats, self_feats, w_enc, w_cls)
    assert out_f32.shape == (B, C)
    assert jnp.max(jnp.abs(out_f32 - ref_f32)) < 1e-3

    # Second call reuses the pre-padded graph features / weights (hoisted padding path).
    out_f32_b = jax.block_until_ready(fwd_f32(adj_norm, self_feats))
    assert jnp.array_equal(out_f32, out_f32_b)

    # --- bf16-input / f32-accumulate path (the fast path on v6e/v7x) ---
    fwd_bf16 = make_supervised_graphsage_forward(feats, w_enc, w_cls,
                                                 compute_dtype=jnp.bfloat16)
    out_bf16 = jax.block_until_ready(fwd_bf16(adj_norm, self_feats))
    ref_bf16 = _reference_forward_matched(adj_norm, feats, self_feats, w_enc, w_cls,
                                          jnp.bfloat16)
    assert out_bf16.shape == (B, C)
    assert jnp.max(jnp.abs(out_bf16 - ref_bf16)) < 1e-2
    # Sanity: bf16 path stays close to the full-precision module output too.
    assert (jnp.max(jnp.abs(out_bf16 - ref_f32))
            / (jnp.max(jnp.abs(ref_f32)) + 1e-6)) < 5e-2

    print("KERNEL_OK")
</pallas_src>

<mosaic_0001>
module attributes {stable_mosaic.version = 11 : i64} {
  func.func @_graphsage_fwd_kernel(%arg0: i32, %arg1: i32, %arg2: memref<16x128xf32, #tpu.memory_space<vmem>>, %arg3: memref<128x128xf32, #tpu.memory_space<vmem>>, %arg4: memref<16x128xf32, #tpu.memory_space<vmem>>, %arg5: memref<128x128xf32, #tpu.memory_space<vmem>>, %arg6: memref<128x128xf32, #tpu.memory_space<vmem>>, %arg7: memref<128x128xf32, #tpu.memory_space<vmem>>, %arg8: memref<16x128xf32, #tpu.memory_space<vmem>>, %arg9: memref<16x128xf32, #tpu.memory_space<vmem>>) attributes {dimension_semantics = [#tpu.dimension_semantics<parallel>, #tpu.dimension_semantics<arbitrary>], iteration_bounds = array<i64: 2, 3>, scalar_prefetch = 0 : i64, scratch_operands = 1 : i64, tpu.core_type = #tpu.core_type<tc>, window_params = [{transform_indices = @transform_0, window_bounds = array<i64: 16, 128>}, {transform_indices = @transform_1, window_bounds = array<i64: 128, 128>}, {transform_indices = @transform_2, window_bounds = array<i64: 16, 128>}, {pipeline_mode = #tpu.pipeline_mode<synchronous>, transform_indices = @transform_3, window_bounds = array<i64: 128, 128>}, {pipeline_mode = #tpu.pipeline_mode<synchronous>, transform_indices = @transform_4, window_bounds = array<i64: 128, 128>}, {pipeline_mode = #tpu.pipeline_mode<synchronous>, transform_indices = @transform_5, window_bounds = array<i64: 128, 128>}, {transform_indices = @transform_6, window_bounds = array<i64: 16, 128>}]} {
    %c0 = arith.constant 0 : index
    %c0_0 = arith.constant 0 : index
    %0 = vector.load %arg2[%c0, %c0_0] : memref<16x128xf32, #tpu.memory_space<vmem>>, vector<16x128xf32>
    %c0_1 = arith.constant 0 : index
    %c0_2 = arith.constant 0 : index
    %1 = vector.load %arg3[%c0_1, %c0_2] : memref<128x128xf32, #tpu.memory_space<vmem>>, vector<128x128xf32>
    %cst = arith.constant dense<0.000000e+00> : vector<16x128xf32>
    %2 = tpu.matmul %0, %1, %cst {dimension_numbers = #tpu.dot_dimension_numbers<[1], [0], [0], [1], [0, 0, 1, 1], [], []>} : vector<16x128xf32>, vector<128x128xf32>, vector<16x128xf32> -> vector<16x128xf32>
    %c0_i32 = arith.constant 0 : i32
    %3 = arith.cmpi eq, %arg1, %c0_i32 : i32
    %4 = arith.extui %3 : i1 to i32
    %c0_i32_3 = arith.constant 0 : i32
    %5 = arith.cmpi ne, %4, %c0_i32_3 : i32
    scf.if %5 {
      %c0_7 = arith.constant 0 : index
      %c0_8 = arith.constant 0 : index
      %12 = vector.load %arg9[%c0_7, %c0_8] : memref<16x128xf32, #tpu.memory_space<vmem>>, vector<16x128xf32>
      tpu.vector_store %arg9[%c0_7, %c0_8], %2 {strides = array<i32>} : memref<16x128xf32, #tpu.memory_space<vmem>>, vector<16x128xf32>,
    } else {
    }
    %c0_i32_4 = arith.constant 0 : i32
    %6 = arith.cmpi ne, %arg1, %c0_i32_4 : i32
    %7 = arith.extui %6 : i1 to i32
    %c0_i32_5 = arith.constant 0 : i32
    %8 = arith.cmpi ne, %7, %c0_i32_5 : i32
    scf.if %8 {
      %c0_7 = arith.constant 0 : index
      %c0_8 = arith.constant 0 : index
      %12 = vector.load %arg9[%c0_7, %c0_8] : memref<16x128xf32, #tpu.memory_space<vmem>>, vector<16x128xf32>
      %13 = arith.addf %12, %2 : vector<16x128xf32>
      %c0_9 = arith.constant 0 : index
      %c0_10 = arith.constant 0 : index
      %14 = vector.load %arg9[%c0_9, %c0_10] : memref<16x128xf32, #tpu.memory_space<vmem>>, vector<16x128xf32>
      tpu.vector_store %arg9[%c0_9, %c0_10], %13 {strides = array<i32>} : memref<16x128xf32, #tpu.memory_space<vmem>>, vector<16x128xf32>,
    } else {
    }
    %c2_i32 = arith.constant 2 : i32
    %9 = arith.cmpi eq, %arg1, %c2_i32 : i32
    %10 = arith.extui %9 : i1 to i32
    %c0_i32_6 = arith.constant 0 : i32
    %11 = arith.cmpi ne, %10, %c0_i32_6 : i32
    scf.if %11 {
      %c0_7 = arith.constant 0 : index
      %c0_8 = arith.constant 0 : index
      %12 = vector.load %arg9[%c0_7, %c0_8] : memref<16x128xf32, #tpu.memory_space<vmem>>, vector<16x128xf32>
      %c0_9 = arith.constant 0 : index
      %c0_10 = arith.constant 0 : index
      %13 = vector.load %arg4[%c0_9, %c0_10] : memref<16x128xf32, #tpu.memory_space<vmem>>, vector<16x128xf32>
      %c0_11 = arith.constant 0 : index
      %c0_12 = arith.constant 0 : index
      %14 = vector.load %arg5[%c0_11, %c0_12] : memref<128x128xf32, #tpu.memory_space<vmem>>, vector<128x128xf32>
      %cst_13 = arith.constant dense<0.000000e+00> : vector<16x128xf32>
      %15 = tpu.matmul %13, %14, %cst_13 {dimension_numbers = #tpu.dot_dimension_numbers<[1], [0], [0], [1], [0, 0, 1, 1], [], []>} : vector<16x128xf32>, vector<128x128xf32>, vector<16x128xf32> -> vector<16x128xf32>
      %c0_14 = arith.constant 0 : index
      %c0_15 = arith.constant 0 : index
      %16 = vector.load %arg6[%c0_14, %c0_15] : memref<128x128xf32, #tpu.memory_space<vmem>>, vector<128x128xf32>
      %cst_16 = arith.constant dense<0.000000e+00> : vector<16x128xf32>
      %17 = tpu.matmul %12, %16, %cst_16 {dimension_numbers = #tpu.dot_dimension_numbers<[1], [0], [0], [1], [0, 0, 1, 1], [], []>} : vector<16x128xf32>, vector<128x128xf32>, vector<16x128xf32> -> vector<16x128xf32>
      %18 = arith.addf %15, %17 : vector<16x128xf32>
      %cst_17 = arith.constant 0.000000e+00 : f32
      %19 = vector.broadcast %cst_17 : f32 to vector<16x128xf32>
      %20 = arith.maximumf %18, %19 : vector<16x128xf32>
      %c0_18 = arith.constant 0 : index
      %c0_19 = arith.constant 0 : index
      %21 = vector.load %arg7[%c0_18, %c0_19] : memref<128x128xf32, #tpu.memory_space<vmem>>, vector<128x128xf32>
      %cst_20 = arith.constant dense<0.000000e+00> : vector<16x128xf32>
      %22 = tpu.matmul %20, %21, %cst_20 {dimension_numbers = #tpu.dot_dimension_numbers<[1], [0], [0], [1], [0, 0, 1, 1], [], []>} : vector<16x128xf32>, vector<128x128xf32>, vector<16x128xf32> -> vector<16x128xf32>
      %c0_21 = arith.constant 0 : index
      %c0_22 = arith.constant 0 : index
      %23 = vector.load %arg8[%c0_21, %c0_22] : memref<16x128xf32, #tpu.memory_space<vmem>>, vector<16x128xf32>
      tpu.vector_store %arg8[%c0_21, %c0_22], %22 {strides = array<i32>} : memref<16x128xf32, #tpu.memory_space<vmem>>, vector<16x128xf32>,
    } else {
    }
    return
  }
  func.func @transform_0(%arg0: i32, %arg1: i32) -> (i32, i32) {
    %c0_i32 = arith.constant 0 : i32
    return %arg0, %arg1 : i32, i32
  }
  func.func @transform_1(%arg0: i32, %arg1: i32) -> (i32, i32) {
    %c0_i32 = arith.constant 0 : i32
    %c0_i32_0 = arith.constant 0 : i32
    return %arg1, %c0_i32 : i32, i32
  }
  func.func @transform_2(%arg0: i32, %arg1: i32) -> (i32, i32) {
    %c0_i32 = arith.constant 0 : i32
    %c0_i32_0 = arith.constant 0 : i32
    return %arg0, %c0_i32 : i32, i32
  }
  func.func @transform_3(%arg0: i32, %arg1: i32) -> (i32, i32) {
    %c0_i32 = arith.constant 0 : i32
    %c0_i32_0 = arith.constant 0 : i32
    %c0_i32_1 = arith.constant 0 : i32
    return %c0_i32, %c0_i32_0 : i32, i32
  }
  func.func @transform_4(%arg0: i32, %arg1: i32) -> (i32, i32) {
    %c0_i32 = arith.constant 0 : i32
    %c0_i32_0 = arith.constant 0 : i32
    %c0_i32_1 = arith.constant 0 : i32
    return %c0_i32, %c0_i32_0 : i32, i32
  }
  func.func @transform_5(%arg0: i32, %arg1: i32) -> (i32, i32) {
    %c0_i32 = arith.constant 0 : i32
    %c0_i32_0 = arith.constant 0 : i32
    %c0_i32_1 = arith.constant 0 : i32
    return %c0_i32, %c0_i32_0 : i32, i32
  }
  func.func @transform_6(%arg0: i32, %arg1: i32) -> (i32, i32) {
    %c0_i32 = arith.constant 0 : i32
    %c0_i32_0 = arith.constant 0 : i32
    return %arg0, %c0_i32 : i32, i32
  }
}

</mosaic_0001>

<llo_original>
// kernel: forward.1
$region0: #{forward.1}
  #allocation0 [shape = 'u32[]', space=smem, size = 0x4, offset = 0x4, fixed_abs, tag = 'smem constant byte address 0x4 - core index']
  #allocation1 [shape = 'u32[72,128]{1,0:T(1,128)}', space=vmem, size = 0x9000, scoped, tag = 'internal scratch']
  #allocation2 [shape = 'f32[16,128]{1,0:T(8,128)}', space=vmem, size = 0x2000, scoped, tag = 'scratch operand']
  %s0 = inlined_call_operand.vmem [shape: f32[32,384], index: 0, kind: input, shape index: {}]
  %s1 = inlined_call_operand.hbm [shape: f32[384,128], index: 1, kind: input, shape index: {}]
  %s2 = inlined_call_operand.vmem [shape: f32[32,128], index: 2, kind: input, shape index: {}]
  %s3 = inlined_call_operand.hbm [shape: f32[128,128], index: 3, kind: input, shape index: {}]
  %s4 = inlined_call_operand.hbm [shape: f32[128,128], index: 4, kind: input, shape index: {}]
  %s5 = inlined_call_operand.vmem [shape: f32[128,128], index: 5, kind: input, shape index: {}]
  %s6 = inlined_call_operand.vmem [shape: f32[32,128], index: 6, kind: output, shape index: {}]
  %s7 = sld [smem:[#allocation0]]
  $region119: #{forward.1} parent=0
    _
  %s9 = ssub.s32 1, %s7
  %s10 = scalar_select 0, %s9, %s7
  $region1: #{forward.1} parent=0
    #allocation3 [shape = 'u8[16384]{0}', space=vmem, size = 0x4000, scoped, tag = 'input window, operand 0']
    #allocation4 [shape = 'u8[131072]{0}', space=vmem, size = 0x20000, scoped, tag = 'input window, operand 1']
    #allocation5 [shape = 's32[2]{0}', space=sflag, size = 0x8, scoped, tag = 'scoped memory for forward.1']
    #allocation6 [shape = 'u8[65536]{0}', space=vmem, size = 0x10000, scoped, tag = 'input window, operand 3, single buffered']
    #allocation7 [shape = 's32[1]{0}', space=sflag, size = 0x4, scoped, tag = 'scoped memory for forward.1']
    #allocation8 [shape = 'u8[65536]{0}', space=vmem, size = 0x10000, scoped, tag = 'input window, operand 4, single buffered']
    %11 = vsyncpa [#allocation5], 0
    %s12 = scalar_lea.sflag [#allocation5], 1
    %13 = vsyncpa %s12, 0
    %14 = vsyncpa [#allocation7], 0
    loop: start=0, step=1, limit=8
    $region2: #{forward.1} parent=1 // loop_pre_header
      _
    $region3: #{forward.1} parent=1 // loop_header
      %s16 = sphi 0, %s20
      %p17 = scmp.ge.s32.totalorder %s16, 8
      %s23 = sphi 0, %s35
      %s24 = sphi 0, %s31
      %s25 = sphi 0, %s23
      %s26 = sphi 0, %s24
      %s27 = sphi 0, %s25
      %s28 = sphi 0, %s26
      %s40 = sphi 0, %s42
      %s43 = sphi 0, %s40
      %s44 = sphi 0, %s43
      %s60 = sphi 0, %s44
      %s66 = sphi 0, %s68
      %s69 = sphi 0, %s66
      %s70 = sphi 0, %s69
      %s86 = sphi 0, %s70
      %s92 = sphi 0, %s94
      %s95 = sphi 0, %s92
      %s96 = sphi 0, %s95
      %s112 = sphi 0, %s96
      %s116 = sphi 0, %s116
      %s118 = sphi 0, %s116
      %s119 = sphi 0, %s118
      %s133 = sphi 0, %s119
      %s137 = sphi 0, %s137
      %s139 = sphi 0, %s137
      %s140 = sphi 0, %s139
      %s154 = sphi 0, %s140
      %s158 = sphi 0, %s158
      %s160 = sphi 0, %s158
      %s161 = sphi 0, %s160
      %s175 = sphi 0, %s161
      %s181 = sphi 0, %s183
      %s184 = sphi 0, %s181
      %s185 = sphi 0, %s184
      %s201 = sphi 0, %s185
    $region4: #{forward.1} parent=1 // loop_header_branch
      %19 = sbr.rel (%p17) target = $region8
    $region5: #{forward.1} parent=1 // loop_body
      %s21 = ssub.s32 %s16, 1
      %s22 = ssub.s32 %s16, 2
      %s29 = sadd.s32 1, %s24
      %p30 = scmp.ge.s32.totalorder %s29, 3
      %s31 = scalar_select %p30, 0, %s29
      %s32 = sadd.s32 1, %s23
      %s33 = scalar_select %p30, %s32, %s23
      %p34 = scmp.ge.s32.totalorder %s33, 2
      %s35 = scalar_select %p34, 0, %s33
      %s36 = ssub.s32 %s23, %s35
      %s37 = ssub.s32 %s24, %s31
      %s38 = sor.u32 %s36, %s37
      %p39 = scmp.eq.s32.totalorder %s38, 0
      %s41 = sadd.s32 %s40, 1
      %s42 = scalar_select %p39, %s40, %s41
      %p45 = pneg %p39
      %p46 = scmp.eq.s32.totalorder %s16, 5
      %p47 = por %p45, %p46
      %p48 = scmp.ne.s32.totalorder %s40, %s43
      %p49 = scmp.eq.s32.totalorder %s16, 0
      %p50 = por %p48, %p49
      %p51 = scmp.ne.s32.totalorder %s40, %s43
      %p52 = scmp.eq.s32.totalorder %s21, 5
      %p53 = por %p51, %p52
      %p54 = scmp.ne.s32.totalorder %s43, %s44
      %p55 = scmp.eq.s32.totalorder %s21, 0
      %p56 = por %p54, %p55
      %p57 = scmp.ne.s32.totalorder %s43, %s44
      %p58 = scmp.eq.s32.totalorder %s22, 5
      %p59 = por %p57, %p58
      %p61 = scmp.ne.s32.totalorder %s44, %s60
      %p62 = scmp.eq.s32.totalorder %s22, 0
      %p63 = por %p61, %p62
      %s64 = ssub.s32 %s24, %s31
      %p65 = scmp.eq.s32.totalorder %s64, 0
      %s67 = sadd.s32 %s66, 1
      %s68 = scalar_select %p65, %s66, %s67
      %p71 = pneg %p65
      %p72 = scmp.eq.s32.totalorder %s16, 5
      %p73 = por %p71, %p72
      %p74 = scmp.ne.s32.totalorder %s66, %s69
      %p75 = scmp.eq.s32.totalorder %s16, 0
      %p76 = por %p74, %p75
      %p77 = scmp.ne.s32.totalorder %s66, %s69
      %p78 = scmp.eq.s32.totalorder %s21, 5
      %p79 = por %p77, %p78
      %p80 = scmp.ne.s32.totalorder %s69, %s70
      %p81 = scmp.eq.s32.totalorder %s21, 0
      %p82 = por %p80, %p81
      %p83 = scmp.ne.s32.totalorder %s69, %s70
      %p84 = scmp.eq.s32.totalorder %s22, 5
      %p85 = por %p83, %p84
      %p87 = scmp.ne.s32.totalorder %s70, %s86
      %p88 = scmp.eq.s32.totalorder %s22, 0
      %p89 = por %p87, %p88
      %s90 = ssub.s32 %s23, %s35
      %p91 = scmp.eq.s32.totalorder %s90, 0
      %s93 = sadd.s32 %s92, 1
      %s94 = scalar_select %p91, %s92, %s93
      %p97 = pneg %p91
      %p98 = scmp.eq.s32.totalorder %s16, 5
      %p99 = por %p97, %p98
      %p100 = scmp.ne.s32.totalorder %s92, %s95
      %p101 = scmp.eq.s32.totalorder %s16, 0
      %p102 = por %p100, %p101
      %p103 = scmp.ne.s32.totalorder %s92, %s95
      %p104 = scmp.eq.s32.totalorder %s21, 5
      %p105 = por %p103, %p104
      %p106 = scmp.ne.s32.totalorder %s95, %s96
      %p107 = scmp.eq.s32.totalorder %s21, 0
      %p108 = por %p106, %p107
      %p109 = scmp.ne.s32.totalorder %s95, %s96
      %p110 = scmp.eq.s32.totalorder %s22, 5
      %p111 = por %p109, %p110
      %p113 = scmp.ne.s32.totalorder %s96, %s112
      %p114 = scmp.eq.s32.totalorder %s22, 0
      %p115 = por %p113, %p114
      %s117 = sadd.s32 %s116, 1
      %p120 = scmp.eq.s32.totalorder %s16, 5
      %p121 = scmp.ne.s32.totalorder %s116, %s118
      %p122 = scmp.eq.s32.totalorder %s16, 0
      %p123 = por %p121, %p122
      %p124 = scmp.ne.s32.totalorder %s116, %s118
      %p125 = scmp.eq.s32.totalorder %s21, 5
      %p126 = por %p124, %p125
      %p127 = scmp.ne.s32.totalorder %s118, %s119
      %p128 = scmp.eq.s32.totalorder %s21, 0
      %p129 = por %p127, %p128
      %p130 = scmp.ne.s32.totalorder %s118, %s119
      %p131 = scmp.eq.s32.totalorder %s22, 5
      %p132 = por %p130, %p131
      %p134 = scmp.ne.s32.totalorder %s119, %s133
      %p135 = scmp.eq.s32.totalorder %s22, 0
      %p136 = por %p134, %p135
      %s138 = sadd.s32 %s137, 1
      %p141 = scmp.eq.s32.totalorder %s16, 5
      %p142 = scmp.ne.s32.totalorder %s137, %s139
      %p143 = scmp.eq.s32.totalorder %s16, 0
      %p144 = por %p142, %p143
      %p145 = scmp.ne.s32.totalorder %s137, %s139
      %p146 = scmp.eq.s32.totalorder %s21, 5
      %p147 = por %p145, %p146
      %p148 = scmp.ne.s32.totalorder %s139, %s140
      %p149 = scmp.eq.s32.totalorder %s21, 0
      %p150 = por %p148, %p149
      %p151 = scmp.ne.s32.totalorder %s139, %s140
      %p152 = scmp.eq.s32.totalorder %s22, 5
      %p153 = por %p151, %p152
      %p155 = scmp.ne.s32.totalorder %s140, %s154
      %p156 = scmp.eq.s32.totalorder %s22, 0
      %p157 = por %p155, %p156
      %s159 = sadd.s32 %s158, 1
      %p162 = scmp.eq.s32.totalorder %s16, 5
      %p163 = scmp.ne.s32.totalorder %s158, %s160
      %p164 = scmp.eq.s32.totalorder %s16, 0
      %p165 = por %p163, %p164
      %p166 = scmp.ne.s32.totalorder %s158, %s160
      %p167 = scmp.eq.s32.totalorder %s21, 5
      %p168 = por %p166, %p167
      %p169 = scmp.ne.s32.totalorder %s160, %s161
      %p170 = scmp.eq.s32.totalorder %s21, 0
      %p171 = por %p169, %p170
      %p172 = scmp.ne.s32.totalorder %s160, %s161
      %p173 = scmp.eq.s32.totalorder %s22, 5
      %p174 = por %p172, %p173
      %p176 = scmp.ne.s32.totalorder %s161, %s175
      %p177 = scmp.eq.s32.totalorder %s22, 0
      %p178 = por %p176, %p177
      %s179 = ssub.s32 %s23, %s35
      %p180 = scmp.eq.s32.totalorder %s179, 0
      %s182 = sadd.s32 %s181, 1
      %s183 = scalar_select %p180, %s181, %s182
      %p186 = pneg %p180
      %p187 = scmp.eq.s32.totalorder %s16, 5
      %p188 = por %p186, %p187
      %p189 = scmp.ne.s32.totalorder %s181, %s184
      %p190 = scmp.eq.s32.totalorder %s16, 0
      %p191 = por %p189, %p190
      %p192 = scmp.ne.s32.totalorder %s181, %s184
      %p193 = scmp.eq.s32.totalorder %s21, 5
      %p194 = por %p192, %p193
      %p195 = scmp.ne.s32.totalorder %s184, %s185
      %p196 = scmp.eq.s32.totalorder %s21, 0
      %p197 = por %p195, %p196
      %p198 = scmp.ne.s32.totalorder %s184, %s185
      %p199 = scmp.eq.s32.totalorder %s22, 5
      %p200 = por %p198, %p199
      %p202 = scmp.ne.s32.totalorder %s185, %s201
      %p203 = scmp.eq.s32.totalorder %s22, 0
      %p204 = por %p202, %p203
      %p205 = scmp.le.s32.totalorder 1, %s16
      %p206 = scmp.lt.s32.totalorder %s16, 7
      %p207 = pnand %p205, %p206
      %p208 = pneg %p207
      // Predicated region
      $region9: #{forward.1} parent=5 // pred_check
        _
      $region10: #{forward.1} parent=5 // pred_check_branch
        %210 = sbr.rel (%p207) target = $region12
      $region11: #{forward.1} parent=5 // pred_region
        %s211 = ssub.s32 %s16, 1
        // Predicated region
        $region13: #{forward.1} parent=11 // pred_check
          %p212 = pneg %p129
        $region14: #{forward.1} parent=11 // pred_check_branch
          %214 = sbr.rel (%p212) target = $region16
        $region15: #{forward.1} parent=11 // pred_region
          %216 = vsyncadd [#allocation7], 0
          %s217 = sshll.u32 %s3, 4
          %s218 = int_to_ptr.hbm [resolvable:$true] %s217
          %s219 = sshll.u32 [#allocation6], 4
          %s220 = int_to_ptr.vmem [resolvable:$true] %s219
          %225 = dma.hbm_to_vmem [thread:$0]  %s218, 2048, %s220, [#allocation7], 128, 128, 8
        $region16: #{forward.1} parent=11 // pred_fallthru
          _
        // Predicated region
        $region17: #{forward.1} parent=11 // pred_check
          %p226 = pneg %p150
        $region18: #{forward.1} parent=11 // pred_check_branch
          %228 = sbr.rel (%p226) target = $region20
        $region19: #{forward.1} parent=11 // pred_region
          %230 = vsyncadd [#allocation7], 0
          %s231 = sshll.u32 %s4, 4
          %s232 = int_to_ptr.hbm [resolvable:$true] %s231
          %s233 = sshll.u32 [#allocation8], 4
          %s234 = int_to_ptr.vmem [resolvable:$true] %s233
          %239 = dma.hbm_to_vmem [thread:$0]  %s232, 2048, %s234, [#allocation7], 128, 128, 8
        $region20: #{forward.1} parent=11 // pred_fallthru
          _
        // Predicated region
        $region21: #{forward.1} parent=11 // pred_check
          %p240 = pneg %p171
        $region22: #{forward.1} parent=11 // pred_check_branch
          %242 = sbr.rel (%p240) target = $region24
        $region23: #{forward.1} parent=11 // pred_region
          _
        $region24: #{forward.1} parent=11 // pred_fallthru
          _
      $region12: #{forward.1} parent=5 // pred_fallthru
        _
      %p243 = scmp.lt.s32.totalorder %s16, 6
      // Predicated region
      $region25: #{forward.1} parent=5 // pred_check
        %p244 = pneg %p243
      $region26: #{forward.1} parent=5 // pred_check_branch
        %246 = sbr.rel (%p244) target = $region28
      $region27: #{forward.1} parent=5 // pred_region
        // Predicated region
        $region29: #{forward.1} parent=27 // pred_check
          %p247 = pneg %p50
        $region30: #{forward.1} parent=27 // pred_check_branch
          %249 = sbr.rel (%p247) target = $region32
        $region31: #{forward.1} parent=27 // pred_region
          %s250 = sand.u32 %s40, 1
          %s251 = sand.u32 %s40, 1
          %s252 = smul.addr %s251, 16
          %s253 = scalar_lea.vmem [#allocation3], %s252
          %s254 = smul.u32 2, %s23
          %s255 = smul.addr %s254, 3
          %s256 = sadd.s32 %s24, %s255
          %s257 = smul.addr %s256, 8
          %s258 = scalar_lea.vmem %s0, %s257
          // Predicated region
          $region33: #{forward.1} parent=31 // pred_check
            _
          $region34: #{forward.1} parent=31 // pred_check_branch
            %260 = sbr.rel (0) target = $region36
          $region35: #{forward.1} parent=31 // pred_region
            // Predicated region
            $region37: #{forward.1} parent=35 // pred_check
              _
            $region38: #{forward.1} parent=35 // pred_check_branch
              %262 = sbr.rel (0) target = $region40
            $region39: #{forward.1} parent=35 // pred_region
              // Predicated region
              $region52: #{forward.1} parent=39 // pred_check
                _
              $region53: #{forward.1} parent=39 // pred_check_branch
                %280 = sbr.rel (0) target = $region55
              $region54: #{forward.1} parent=39 // pred_region
                loop: start=0, step=1, limit=1
                $region56: #{forward.1} parent=54 // loop_pre_header
                  _
                $region57: #{forward.1} parent=54 // loop_header
                  %s282 = sphi 0, %s286
                  %p283 = scmp.ge.s32.totalorder %s282, 1
                  %s287 = sphi %s258, %s258
                  %s288 = sphi %s253, %s253
                $region58: #{forward.1} parent=54 // loop_header_branch
                  %285 = sbr.rel (%p283) target = $region62
                $region59: #{forward.1} parent=54 // loop_body
                  %v289 = vld [vmem:[%s287] sm:$0xff]
                  %290 = vst [vmem:[%s288] sm:$0xff] %v289
                  %v291 = vld [vmem:[%s287 + $0x18] sm:$0xff]
                  %292 = vst [vmem:[%s288 + $0x8] sm:$0xff] %v291
                $region60: #{forward.1} parent=54 // loop_footer
                  %s286 = sadd.s32 1, %s282
                $region61: #{forward.1} parent=54 // loop_footer_branch
                  %281 = sbr.rel target = $region57
                $region62: #{forward.1} parent=54 // loop_exit
                  _
              $region55: #{forward.1} parent=39 // pred_fallthru
                _
              // Predicated region
              $region63: #{forward.1} parent=39 // pred_check
                _
              $region64: #{forward.1} parent=39 // pred_check_branch
                %294 = sbr.rel target = $region66
              $region65: #{forward.1} parent=39 // pred_region
                _
              $region66: #{forward.1} parent=39 // pred_fallthru
                _
            $region40: #{forward.1} parent=35 // pred_fallthru
              _
            // Predicated region
            $region41: #{forward.1} parent=35 // pred_check
              _
            $region42: #{forward.1} parent=35 // pred_check_branch
              %264 = sbr.rel target = $region44
            $region43: #{forward.1} parent=35 // pred_region
              %s266 = ssub.s32 256, 1
              loop: start=0, step=1, limit=1
              $region45: #{forward.1} parent=43 // loop_pre_header
                _
              $region46: #{forward.1} parent=43 // loop_header
                %s268 = sphi 0, %s272
                %p269 = scmp.ge.s32.totalorder %s268, 1
                %s273 = sphi %s258, %s258
                %s274 = sphi %s253, %s253
              $region47: #{forward.1} parent=43 // loop_header_branch
                %271 = sbr.rel (%p269) target = $region51
              $region48: #{forward.1} parent=43 // loop_body
                %v275 = vld [vmem:[%s273] sm:%s266]
                %276 = vst [vmem:[%s274] sm:%s266] %v275
                %v277 = vld [vmem:[%s273 + $0x18] sm:%s266]
                %278 = vst [vmem:[%s274 + $0x8] sm:%s266] %v277
              $region49: #{forward.1} parent=43 // loop_footer
                %s272 = sadd.s32 1, %s268
              $region50: #{forward.1} parent=43 // loop_footer_branch
                %267 = sbr.rel target = $region46
              $region51: #{forward.1} parent=43 // loop_exit
                _
            $region44: #{forward.1} parent=35 // pred_fallthru
              _
          $region36: #{forward.1} parent=31 // pred_fallthru
            _
          %295 = vnop
        $region32: #{forward.1} parent=27 // pred_fallthru
          _
        // Predicated region
        $region67: #{forward.1} parent=27 // pred_check
          %p296 = pneg %p76
        $region68: #{forward.1} parent=27 // pred_check_branch
          %298 = sbr.rel (%p296) target = $region70
        $region69: #{forward.1} parent=27 // pred_region
          %s299 = sand.u32 %s66, 1
          %s300 = scalar_lea.sflag [#allocation5], %s299
          %s301 = sand.u32 %s66, 1
          %s302 = smul.addr %s301, 128
          %s303 = scalar_lea.vmem [#allocation4], %s302
          %s304 = smul.u32 16, %s24
          %306 = vsyncadd %s300, 0
          %s307 = smul.addr %s304, 8
          %s308 = scalar_lea.hbm %s1, %s307
          %s309 = sshll.u32 %s308, 4
          %s310 = int_to_ptr.hbm [resolvable:$true] %s309
          %s311 = sshll.u32 %s303, 4
          %s312 = int_to_ptr.vmem [resolvable:$true] %s311
          %317 = dma.hbm_to_vmem [thread:$0]  %s310, 2048, %s312, %s300, 128, 128, 8
        $region70: #{forward.1} parent=27 // pred_fallthru
          _
        // Predicated region
        $region71: #{forward.1} parent=27 // pred_check
          %p318 = pneg %p102
        $region72: #{forward.1} parent=27 // pred_check_branch
          %320 = sbr.rel (%p318) target = $region74
        $region73: #{forward.1} parent=27 // pred_region
          %s321 = smul.u32 2, %s23
          %p322 = scmp.lt.s32.totalorder %s321, 3
          %s323 = scalar_select %p322, %s321, 3
          %s324 = smul.addr %s323, 8
          %s325 = scalar_lea.vmem %s2, %s324
          %s326 = smul.u32 2, %s23
        $region74: #{forward.1} parent=27 // pred_fallthru
          _
      $region28: #{forward.1} parent=5 // pred_fallthru
        _
      %p327 = scmp.le.s32.totalorder 1, %s16
      %p328 = scmp.lt.s32.totalorder %s16, 7
      %p329 = pnand %p327, %p328
      %p330 = pneg %p329
      // Predicated region
      $region75: #{forward.1} parent=5 // pred_check
        _
      $region76: #{forward.1} parent=5 // pred_check_branch
        %332 = sbr.rel (%p329) target = $region78
      $region77: #{forward.1} parent=5 // pred_region
        %s333 = ssub.s32 %s16, 1
        %s334 = sand.u32 %s43, 1
        %s335 = sand.u32 %s43, 1
        %s336 = smul.addr %s335, 16
        %s337 = scalar_lea.vmem [#allocation3], %s336
        // Predicated region
        $region79: #{forward.1} parent=77 // pred_check
          %p338 = pneg %p56
        $region80: #{forward.1} parent=77 // pred_check_branch
          %340 = sbr.rel (%p338) target = $region82
        $region81: #{forward.1} parent=77 // pred_region
          _
        $region82: #{forward.1} parent=77 // pred_fallthru
          _
        %s341 = sand.u32 %s69, 1
        %s342 = scalar_lea.sflag [#allocation5], %s341
        %s343 = sand.u32 %s69, 1
        %s344 = smul.addr %s343, 128
        %s345 = scalar_lea.vmem [#allocation4], %s344
        // Predicated region
        $region83: #{forward.1} parent=77 // pred_check
          %p346 = pneg %p82
        $region84: #{forward.1} parent=77 // pred_check_branch
          %348 = sbr.rel (%p346) target = $region86
        $region85: #{forward.1} parent=77 // pred_region
          %350 = dma.done %s342, 2048
        $region86: #{forward.1} parent=77 // pred_fallthru
          _
        // Predicated region
        $region87: #{forward.1} parent=77 // pred_check
          %p351 = pneg %p129
        $region88: #{forward.1} parent=77 // pred_check_branch
          %353 = sbr.rel (%p351) target = $region90
        $region89: #{forward.1} parent=77 // pred_region
          %355 = dma.done [#allocation7], 2048
        $region90: #{forward.1} parent=77 // pred_fallthru
          _
        // Predicated region
        $region91: #{forward.1} parent=77 // pred_check
          %p356 = pneg %p150
        $region92: #{forward.1} parent=77 // pred_check_branch
          %358 = sbr.rel (%p356) target = $region94
        $region93: #{forward.1} parent=77 // pred_region
          %360 = dma.done [#allocation7], 2048
        $region94: #{forward.1} parent=77 // pred_fallthru
          _
        %s361 = sand.u32 %s43, 1
        %s362 = sand.u32 %s43, 1
        %s363 = smul.addr %s362, 16
        %s364 = scalar_lea.vmem [#allocation3], %s363
        %p365 = pneg %p56
        %p366 = pneg %p53
        %s367 = sand.u32 %s69, 1
        %s368 = scalar_lea.sflag [#allocation5], %s367
        %s369 = sand.u32 %s69, 1
        %s370 = smul.addr %s369, 128
        %s371 = scalar_lea.vmem [#allocation4], %s370
        %p372 = pneg %p82
        %p373 = pneg %p79
        %s374 = smul.u32 2, %s25
        %p375 = scmp.lt.s32.totalorder %s374, 3
        %s376 = scalar_select %p375, %s374, 3
        %s377 = smul.addr %s376, 8
        %s378 = scalar_lea.vmem %s2, %s377
        %p379 = pneg %p108
        %p380 = pneg %p105
        %p381 = pneg %p129
        %p382 = pneg %p126
        %p383 = pneg %p150
        %p384 = pneg %p147
        %p385 = pneg %p171
        %p386 = pneg %p168
        %p387 = pneg %p197
        %p388 = pneg %p194
        %s389 = smul.u32 2, %s25
        %p390 = scmp.lt.s32.totalorder %s389, 3
        %s391 = scalar_select %p390, %s389, 3
        %s392 = smul.addr %s391, 8
        %s393 = scalar_lea.vmem %s6, %s392
        %s394 = smul.u32 2, %s25
        %s395 = smul.u32 16, %s26
        %s396 = smul.u32 2, %s25
        %p397 = scmp.lt.s32.totalorder %s396, 3
        %s398 = scalar_select %p397, %s396, 3
        %s399 = smul.addr %s398, 8
        %s400 = scalar_lea.vmem %s2, %s399
        %s401 = smul.u32 2, %s25
        %s402 = smul.u32 2, %s25
        %p403 = scmp.lt.s32.totalorder %s402, 3
        %s404 = scalar_select %p403, %s402, 3
        %s405 = smul.addr %s404, 8
        %s406 = scalar_lea.vmem %s6, %s405
        %s407 = smul.u32 2, %s25
        %v408 = vld [vmem:[%s337] sm:$0xff]
        %v409 = vld [vmem:[%s337 + $0x8] sm:$0xff]
        %v410 = vld [vmem:[%s345] sm:$0xff]
        %v411 = vld [vmem:[%s345 + $0x8] sm:$0xff]
        %v412 = vld [vmem:[%s345 + $0x10] sm:$0xff]
        %v413 = vld [vmem:[%s345 + $0x18] sm:$0xff]
        %v414 = vld [vmem:[%s345 + $0x20] sm:$0xff]
        %v415 = vld [vmem:[%s345 + $0x28] sm:$0xff]
        %v416 = vld [vmem:[%s345 + $0x30] sm:$0xff]
        %v417 = vld [vmem:[%s345 + $0x38] sm:$0xff]
        %v418 = vld [vmem:[%s345 + $0x40] sm:$0xff]
        %v419 = vld [vmem:[%s345 + $0x48] sm:$0xff]
        %v420 = vld [vmem:[%s345 + $0x50] sm:$0xff]
        %v421 = vld [vmem:[%s345 + $0x58] sm:$0xff]
        %v422 = vld [vmem:[%s345 + $0x60] sm:$0xff]
        %v423 = vld [vmem:[%s345 + $0x68] sm:$0xff]
        %v424 = vld [vmem:[%s345 + $0x70] sm:$0xff]
        %v425 = vld [vmem:[%s345 + $0x78] sm:$0xff]
        %426 = vmatpush.msra.mxu0 %v425
        %427 = vmatpush.msra.mxu0 %v424
        %428 = vmatpush.msra.mxu0 %v423
        %429 = vmatpush.msra.mxu0 %v422
        %430 = vmatpush.msra.mxu0 %v421
        %431 = vmatpush.msra.mxu0 %v420
        %432 = vmatpush.msra.mxu0 %v419
        %433 = vmatpush.msra.mxu0 %v418
        %434 = vmatpush.msra.mxu0 %v417
        %435 = vmatpush.msra.mxu0 %v416
        %436 = vmatpush.msra.mxu0 %v415
        %437 = vmatpush.msra.mxu0 %v414
        %438 = vmatpush.msra.mxu0 %v413
        %439 = vmatpush.msra.mxu0 %v412
        %440 = vmatpush.msra.mxu0 %v411
        %441 = vmatpush.msra.mxu0 %v410
        %442 = vmatmul.f32.gmra.mxu0 %v408
        %v443 = vpop.f32.mrf.mxu0
        %v444 = vadd.f32 0.0, %v443
        %445 = vmatmul.f32.gmra.mxu0 %v409
        %v446 = vpop.f32.mrf.mxu0
        %v447 = vadd.f32 0.0, %v446
        %448 = vdwg.mxu0
        %p449 = scmp.eq.s32.totalorder %s26, 0
        // Predicated region
        $region95: #{forward.1} parent=77 // pred_check
          %p450 = pneg %p449
        $region96: #{forward.1} parent=77 // pred_check_branch
          %452 = sbr.rel (%p450) target = $region98
        $region97: #{forward.1} parent=77 // pred_region
          %453 = vst [vmem:[#allocation2] sm:$0xff] %v444
          %454 = vst [vmem:[#allocation2 + $0x8] sm:$0xff] %v447
        $region98: #{forward.1} parent=77 // pred_fallthru
          _
        %p455 = scmp.ne.s32.totalorder %s26, 0
        // Predicated region
        $region99: #{forward.1} parent=77 // pred_check
          %p456 = pneg %p455
        $region100: #{forward.1} parent=77 // pred_check_branch
          %458 = sbr.rel (%p456) target = $region102
        $region101: #{forward.1} parent=77 // pred_region
          %v459 = vld [vmem:[#allocation2] sm:$0xff]
          %v460 = vld [vmem:[#allocation2 + $0x8] sm:$0xff]
          %v461 = vadd.f32 %v459, %v444
          %v462 = vadd.f32 %v460, %v447
          %463 = vst [vmem:[#allocation2] sm:$0xff] %v461
          %464 = vst [vmem:[#allocation2 + $0x8] sm:$0xff] %v462
        $region102: #{forward.1} parent=77 // pred_fallthru
          _
        %p465 = scmp.eq.s32.totalorder %s26, 2
        // Predicated region
        $region103: #{forward.1} parent=77 // pred_check
          %p466 = pneg %p465
        $region104: #{forward.1} parent=77 // pred_check_branch
          %468 = sbr.rel (%p466) target = $region106
        $region105: #{forward.1} parent=77 // pred_region
          %v469 = vld [vmem:[#allocation2] sm:$0xff]
          %v470 = vld [vmem:[#allocation2 + $0x8] sm:$0xff]
          %v471 = vld [vmem:[%s400] sm:$0xff]
          %v472 = vld [vmem:[%s400 + $0x8] sm:$0xff]
          %v473 = vld [vmem:[#allocation6] sm:$0xff]
          %v474 = vld [vmem:[#allocation6 + $0x8] sm:$0xff]
          %v475 = vld [vmem:[#allocation6 + $0x10] sm:$0xff]
          %v476 = vld [vmem:[#allocation6 + $0x18] sm:$0xff]
          %v477 = vld [vmem:[#allocation6 + $0x20] sm:$0xff]
          %v478 = vld [vmem:[#allocation6 + $0x28] sm:$0xff]
          %v479 = vld [vmem:[#allocation6 + $0x30] sm:$0xff]
          %v480 = vld [vmem:[#allocation6 + $0x38] sm:$0xff]
          %v481 = vld [vmem:[#allocation6 + $0x40] sm:$0xff]
          %v482 = vld [vmem:[#allocation6 + $0x48] sm:$0xff]
          %v483 = vld [vmem:[#allocation6 + $0x50] sm:$0xff]
          %v484 = vld [vmem:[#allocation6 + $0x58] sm:$0xff]
          %v485 = vld [vmem:[#allocation6 + $0x60] sm:$0xff]
          %v486 = vld [vmem:[#allocation6 + $0x68] sm:$0xff]
          %v487 = vld [vmem:[#allocation6 + $0x70] sm:$0xff]
          %v488 = vld [vmem:[#allocation6 + $0x78] sm:$0xff]
          %v489 = vld [vmem:[#allocation8] sm:$0xff]
          %v490 = vld [vmem:[#allocation8 + $0x8] sm:$0xff]
          %v491 = vld [vmem:[#allocation8 + $0x10] sm:$0xff]
          %v492 = vld [vmem:[#allocation8 + $0x18] sm:$0xff]
          %v493 = vld [vmem:[#allocation8 + $0x20] sm:$0xff]
          %v494 = vld [vmem:[#allocation8 + $0x28] sm:$0xff]
          %v495 = vld [vmem:[#allocation8 + $0x30] sm:$0xff]
          %v496 = vld [vmem:[#allocation8 + $0x38] sm:$0xff]
          %v497 = vld [vmem:[#allocation8 + $0x40] sm:$0xff]
          %v498 = vld [vmem:[#allocation8 + $0x48] sm:$0xff]
          %v499 = vld [vmem:[#allocation8 + $0x50] sm:$0xff]
          %v500 = vld [vmem:[#allocation8 + $0x58] sm:$0xff]
          %v501 = vld [vmem:[#allocation8 + $0x60] sm:$0xff]
          %v502 = vld [vmem:[#allocation8 + $0x68] sm:$0xff]
          %v503 = vld [vmem:[#allocation8 + $0x70] sm:$0xff]
          %v504 = vld [vmem:[#allocation8 + $0x78] sm:$0xff]
          %505 = vmatpush.msra.mxu0 %v504
          %506 = vmatpush.msra.mxu0 %v503
          %507 = vmatpush.msra.mxu0 %v502
          %508 = vmatpush.msra.mxu0 %v501
          %509 = vmatpush.msra.mxu0 %v500
          %510 = vmatpush.msra.mxu0 %v499
          %511 = vmatpush.msra.mxu0 %v498
          %512 = vmatpush.msra.mxu0 %v497
          %513 = vmatpush.msra.mxu0 %v496
          %514 = vmatpush.msra.mxu0 %v495
          %515 = vmatpush.msra.mxu0 %v494
          %516 = vmatpush.msra.mxu0 %v493
          %517 = vmatpush.msra.mxu0 %v492
          %518 = vmatpush.msra.mxu0 %v491
          %519 = vmatpush.msra.mxu0 %v490
          %520 = vmatpush.msra.mxu0 %v489
          %521 = vmatmul.f32.gmra.mxu0 %v469
          %v522 = vpop.f32.mrf.mxu0
          %v523 = vadd.f32 0.0, %v522
          %524 = vmatmul.f32.gmra.mxu0 %v470
          %v525 = vpop.f32.mrf.mxu0
          %v526 = vadd.f32 0.0, %v525
          %527 = vdwg.mxu0
          %528 = vmatpush.msra.mxu0 %v488
          %529 = vmatpush.msra.mxu0 %v487
          %530 = vmatpush.msra.mxu0 %v486
          %531 = vmatpush.msra.mxu0 %v485
          %532 = vmatpush.msra.mxu0 %v484
          %533 = vmatpush.msra.mxu0 %v483
          %534 = vmatpush.msra.mxu0 %v482
          %535 = vmatpush.msra.mxu0 %v481
          %536 = vmatpush.msra.mxu0 %v480
          %537 = vmatpush.msra.mxu0 %v479
          %538 = vmatpush.msra.mxu0 %v478
          %539 = vmatpush.msra.mxu0 %v477
          %540 = vmatpush.msra.mxu0 %v476
          %541 = vmatpush.msra.mxu0 %v475
          %542 = vmatpush.msra.mxu0 %v474
          %543 = vmatpush.msra.mxu0 %v473
          %544 = vmatmul.f32.gmra.mxu0 %v471
          %v545 = vpop.f32.mrf.mxu0
          %v546 = vadd.f32 %v523, %v545
          %547 = vmatmul.f32.gmra.mxu0 %v472
          %v548 = vpop.f32.mrf.mxu0
          %v549 = vadd.f32 %v526, %v548
          %550 = vdwg.mxu0
          %v551 = vmax.f32 %v546, 0.0
          %v552 = vmax.f32 %v549, 0.0
          %v553 = vld [vmem:[%s5] sm:$0xff]
          %v554 = vld [vmem:[%s5 + $0x8] sm:$0xff]
          %v555 = vld [vmem:[%s5 + $0x10] sm:$0xff]
          %v556 = vld [vmem:[%s5 + $0x18] sm:$0xff]
          %v557 = vld [vmem:[%s5 + $0x20] sm:$0xff]
          %v558 = vld [vmem:[%s5 + $0x28] sm:$0xff]
          %v559 = vld [vmem:[%s5 + $0x30] sm:$0xff]
          %v560 = vld [vmem:[%s5 + $0x38] sm:$0xff]
          %v561 = vld [vmem:[%s5 + $0x40] sm:$0xff]
          %v562 = vld [vmem:[%s5 + $0x48] sm:$0xff]
          %v563 = vld [vmem:[%s5 + $0x50] sm:$0xff]
          %v564 = vld [vmem:[%s5 + $0x58] sm:$0xff]
          %v565 = vld [vmem:[%s5 + $0x60] sm:$0xff]
          %v566 = vld [vmem:[%s5 + $0x68] sm:$0xff]
          %v567 = vld [vmem:[%s5 + $0x70] sm:$0xff]
          %v568 = vld [vmem:[%s5 + $0x78] sm:$0xff]
          %569 = vmatpush.msra.mxu0 %v568
          %570 = vmatpush.msra.mxu0 %v567
          %571 = vmatpush.msra.mxu0 %v566
          %572 = vmatpush.msra.mxu0 %v565
          %573 = vmatpush.msra.mxu0 %v564
          %574 = vmatpush.msra.mxu0 %v563
          %575 = vmatpush.msra.mxu0 %v562
          %576 = vmatpush.msra.mxu0 %v561
          %577 = vmatpush.msra.mxu0 %v560
          %578 = vmatpush.msra.mxu0 %v559
          %579 = vmatpush.msra.mxu0 %v558
          %580 = vmatpush.msra.mxu0 %v557
          %581 = vmatpush.msra.mxu0 %v556
          %582 = vmatpush.msra.mxu0 %v555
          %583 = vmatpush.msra.mxu0 %v554
          %584 = vmatpush.msra.mxu0 %v553
          %585 = vmatmul.f32.gmra.mxu0 %v551
          %v586 = vpop.f32.mrf.mxu0
          %v587 = vadd.f32 0.0, %v586
          %588 = vmatmul.f32.gmra.mxu0 %v552
          %v589 = vpop.f32.mrf.mxu0
          %v590 = vadd.f32 0.0, %v589
          %591 = vdwg.mxu0
          %592 = vst [vmem:[%s406] sm:$0xff] %v587
          %593 = vst [vmem:[%s406 + $0x8] sm:$0xff] %v590
        $region106: #{forward.1} parent=77 // pred_fallthru
          _
        %s594 = smul.u32 2, %s25
        %p595 = scmp.lt.s32.totalorder %s594, 3
        %s596 = scalar_select %p595, %s594, 3
        %s597 = smul.addr %s596, 8
        %s598 = scalar_lea.vmem %s6, %s597
        // Predicated region
        $region107: #{forward.1} parent=77 // pred_check
          %p599 = pneg %p194
        $region108: #{forward.1} parent=77 // pred_check_branch
          %601 = sbr.rel (%p599) target = $region110
        $region109: #{forward.1} parent=77 // pred_region
          %s602 = smul.u32 2, %s25
        $region110: #{forward.1} parent=77 // pred_fallthru
          _
      $region78: #{forward.1} parent=5 // pred_fallthru
        _
      %p603 = scmp.le.s32.totalorder 2, %s16
      // Predicated region
      $region111: #{forward.1} parent=5 // pred_check
        %p604 = pneg %p603
      $region112: #{forward.1} parent=5 // pred_check_branch
        %606 = sbr.rel (%p604) target = $region114
      $region113: #{forward.1} parent=5 // pred_region
        %s607 = ssub.s32 %s16, 2
        // Predicated region
        $region115: #{forward.1} parent=113 // pred_check
          %p608 = pneg %p200
        $region116: #{forward.1} parent=113 // pred_check_branch
          %610 = sbr.rel (%p608) target = $region118
        $region117: #{forward.1} parent=113 // pred_region
          %s611 = smul.u32 2, %s27
          %p612 = scmp.lt.s32.totalorder %s611, 3
          %s613 = scalar_select %p612, %s611, 3
          %s614 = smul.addr %s613, 8
          %s615 = scalar_lea.vmem %s6, %s614
        $region118: #{forward.1} parent=113 // pred_fallthru
          _
      $region114: #{forward.1} parent=5 // pred_fallthru
        _
    $region6: #{forward.1} parent=1 // loop_footer
      %s20 = sadd.s32 1, %s16
    $region7: #{forward.1} parent=1 // loop_footer_branch
      %15 = sbr.rel target = $region3
    $region8: #{forward.1} parent=1 // loop_exit
      _
    %616 = vsyncpa [#allocation5], 1
    %s617 = scalar_lea.sflag [#allocation5], 1
    %618 = vsyncpa %s617, 1
    %619 = vsyncpa [#allocation7], 1

</llo_original>
